<compile_context>
chip_gen: v7x
topology: tpu7x:2x2x1
jax: 0.10.0
libtpu: 0.0.40
codegen_flags: <defaults>
</compile_context>

<pallas_src>
import jax
import jax.numpy as jnp
from jax.experimental import pallas as pl
from jax.experimental.pallas import tpu as pltpu


def _round_up(x, m):
    return -(-x // m) * m


def _pos_embed_kernel(emb_ref, out_ref):
    # emb_ref: (TL, D) row-tile of the embedding table (already in VMEM).
    # out_ref: (1, TL, D) one batch-slice of the output for this seq tile.
    out_ref[...] = emb_ref[...][None, :, :].astype(out_ref.dtype)


def _sublane_multiple(dtype):
    # Native sublane tile: 8 rows for 4-byte, 16 for 2-byte, 32 for 1-byte.
    return max(8, 32 // jnp.dtype(dtype).itemsize)


def _choose_seq_tile(seq_len, d_model, itemsize, sublane, bs,
                     vmem_block_budget_bytes, max_tile=2048):
    """Largest sublane-aligned TL whose double-buffered blocks fit VMEM budget.

    Per grid step we hold ~2 table blocks (TL, D) + 2 output blocks (1, TL, D)
    => ~4 * TL * D * itemsize bytes.
    """
    bytes_per_row = 4 * d_model * itemsize
    tl_cap = (vmem_block_budget_bytes // bytes_per_row) // sublane * sublane
    tl_cap = max(sublane, min(tl_cap, max_tile))
    tl = min(_round_up(seq_len, sublane), tl_cap)
    # v7x has 2 TensorCores: with bs == 1, try to expose >= 2 parallel steps.
    if bs == 1 and tl >= seq_len and seq_len > sublane:
        tl = _round_up(-(-seq_len // 2), sublane)
    return max(sublane, (tl // sublane) * sublane)


def learned_positional_encoding_1d(seq_in_embeds, embedding_weight,
                                   *,
                                   small_bypass_bytes=256 * 1024,
                                   vmem_block_budget_bytes=16 * 1024 * 1024):
    """seq_in_embeds: [bs, L, d] (values unused); embedding_weight: [E, d]."""
    bs, seq_len, d_model = seq_in_embeds.shape
    num_embedding, num_feature = embedding_weight.shape
    assert d_model == num_feature
    assert seq_len <= num_embedding, "position index would exceed embedding table"

    out_dtype = embedding_weight.dtype
    itemsize = jnp.dtype(out_dtype).itemsize
    out_shape = (bs, seq_len, num_feature)

    # Tiny outputs: pallas_call/pipeline setup overhead dwarfs a few-KB copy.
    if bs * seq_len * num_feature * itemsize <= small_bypass_bytes:
        return jnp.broadcast_to(embedding_weight[:seq_len][None, :, :], out_shape)

    sublane = _sublane_multiple(out_dtype)
    tl = _choose_seq_tile(seq_len, num_feature, itemsize, sublane, bs,
                          vmem_block_budget_bytes)
    grid_l = -(-seq_len // tl)

    # Pad the (small) table so every accessed (TL, D) input block is fully
    # in bounds; pad is < TL rows and only needed when E is close to L.
    needed_rows = grid_l * tl
    if needed_rows > num_embedding:
        table = jnp.pad(embedding_weight,
                        ((0, needed_rows - num_embedding), (0, 0)))
    else:
        table = embedding_weight

    out = pl.pallas_call(
        _pos_embed_kernel,
        out_shape=jax.ShapeDtypeStruct(out_shape, out_dtype),
        grid_spec=pltpu.PrefetchScalarGridSpec(
            num_scalar_prefetch=0,
            grid=(grid_l, bs),
            in_specs=[
                # Same block index across batch steps -> table DMA skipped
                # on consecutive b; each table row read from HBM once/tile.
                pl.BlockSpec((tl, num_feature), lambda l, b: (l, 0)),
            ],
            out_specs=pl.BlockSpec((1, tl, num_feature),
                                   lambda l, b: (b, l, 0)),
        ),
        compiler_params=pltpu.CompilerParams(
            dimension_semantics=("parallel", "parallel"),
            vmem_limit_bytes=32 * 1024 * 1024,
        ),
    )(table)
    return out


if __name__ == "__main__":
    key = jax.random.PRNGKey(0)
    k1, k2, k3, k4, k5, k6 = jax.random.split(key, 6)

    # --- Case 1: module defaults (tiny shapes -> XLA bypass path) ---
    E1, D1, bs1, L1 = 5, 256, 2, 5
    w1 = jax.random.normal(k1, (E1, D1), dtype=jnp.float32)
    x1 = jax.random.normal(k2, (bs1, L1, D1), dtype=jnp.float32)
    o1 = jax.block_until_ready(learned_positional_encoding_1d(x1, w1))
    r1 = jnp.broadcast_to(w1[:L1][None, :, :], (bs1, L1, D1))
    assert o1.shape == r1.shape
    assert jnp.allclose(o1, r1, atol=1e-6), "mismatch vs reference (case 1)"

    # --- Case 2: 8-aligned seq_len, Pallas path forced (bypass disabled) ---
    E2, D2, bs2, L2 = 80, 256, 2, 64
    w2 = jax.random.normal(k3, (E2, D2), dtype=jnp.float32)
    x2 = jax.random.normal(k4, (bs2, L2, D2), dtype=jnp.float32)
    o2 = jax.block_until_ready(
        learned_positional_encoding_1d(x2, w2, small_bypass_bytes=0))
    r2 = jnp.broadcast_to(w2[:L2][None, :, :], (bs2, L2, D2))
    assert o2.shape == r2.shape
    assert jnp.allclose(o2, r2, atol=1e-6), "mismatch vs reference (case 2)"

    # --- Case 3: ragged (non-8-aligned) L == E, exercises table padding +
    #             masked partial output block ---
    E3, D3, bs3, L3 = 37, 128, 3, 37
    w3 = jax.random.normal(k5, (E3, D3), dtype=jnp.float32)
    x3 = jax.random.normal(k6, (bs3, L3, D3), dtype=jnp.float32)
    o3 = jax.block_until_ready(
        learned_positional_encoding_1d(x3, w3, small_bypass_bytes=0))
    r3 = jnp.broadcast_to(w3[:L3][None, :, :], (bs3, L3, D3))
    assert o3.shape == r3.shape
    assert jnp.allclose(o3, r3, atol=1e-6), "mismatch vs reference (case 3)"

    print("KERNEL_OK")
</pallas_src>

<mosaic_0001>
module attributes {stable_mosaic.version = 11 : i64} {
  func.func @_pos_embed_kernel(%arg0: i32, %arg1: i32, %arg2: memref<64x256xf32, #tpu.memory_space<vmem>>, %arg3: memref<1x64x256xf32, #tpu.memory_space<vmem>>) attributes {dimension_semantics = [#tpu.dimension_semantics<parallel>, #tpu.dimension_semantics<parallel>], iteration_bounds = array<i64: 1, 2>, scalar_prefetch = 0 : i64, scratch_operands = 0 : i64, tpu.core_type = #tpu.core_type<tc>, window_params = [{transform_indices = @transform_0, window_bounds = array<i64: 64, 256>}, {transform_indices = @transform_1, window_bounds = array<i64: 1, 64, 256>}]} {
    %c0 = arith.constant 0 : index
    %c0_0 = arith.constant 0 : index
    %0 = vector.load %arg2[%c0, %c0_0] : memref<64x256xf32, #tpu.memory_space<vmem>>, vector<64x256xf32>
    %1 = vector.shape_cast %0 : vector<64x256xf32> to vector<1x64x256xf32>
    %c0_1 = arith.constant 0 : index
    %c0_2 = arith.constant 0 : index
    %c0_3 = arith.constant 0 : index
    %2 = vector.load %arg3[%c0_1, %c0_2, %c0_3] : memref<1x64x256xf32, #tpu.memory_space<vmem>>, vector<1x64x256xf32>
    tpu.vector_store %arg3[%c0_1, %c0_2, %c0_3], %1 {strides = array<i32>} : memref<1x64x256xf32, #tpu.memory_space<vmem>>, vector<1x64x256xf32>,
    return
  }
  func.func @transform_0(%arg0: i32, %arg1: i32) -> (i32, i32) {
    %c0_i32 = arith.constant 0 : i32
    %c0_i32_0 = arith.constant 0 : i32
    return %arg0, %c0_i32 : i32, i32
  }
  func.func @transform_1(%arg0: i32, %arg1: i32) -> (i32, i32, i32) {
    %c0_i32 = arith.constant 0 : i32
    %c0_i32_0 = arith.constant 0 : i32
    return %arg1, %arg0, %c0_i32 : i32, i32, i32
  }
}

</mosaic_0001>

<llo_original>
// kernel: tpu_custom_call.1
$region0: #{tpu_custom_call.1}
  #allocation0 [shape = 'u32[]', space=smem, size = 0x4, offset = 0x4, fixed_abs, tag = 'smem constant byte address 0x4 - core index']
  #allocation1 [shape = 'u32[144,128]{1,0:T(1,128)}', space=vmem, size = 0x12000, scoped, tag = 'internal scratch']
  %s0 = inlined_call_operand.hbm [shape: f32[80,256], index: 0, kind: input, shape index: {}]
  %s1 = inlined_call_operand.hbm [shape: f32[2,64,256], index: 1, kind: output, shape index: {}]
  %s2 = sld [smem:[#allocation0]]
  $region41: #{tpu_custom_call.1} parent=0
    _
  %s4 = ssub.s32 1, %s2
  %s5 = scalar_select 0, %s4, %s2
  $region1: #{tpu_custom_call.1} parent=0
    #allocation2 [shape = 'u8[65536]{0}', space=vmem, size = 0x10000, scoped, tag = 'input window, operand 0, single buffered']
    #allocation3 [shape = 's32[2]{0}', space=sflag, size = 0x8, scoped, tag = 'scoped memory for tpu_custom_call.1']
    #allocation4 [shape = 's32[2]{0}', space=sflag, size = 0x8, scoped, tag = 'scoped memory for tpu_custom_call.1']
    #allocation5 [shape = 'u8[131072]{0}', space=vmem, size = 0x20000, scoped, tag = 'output window, operand 0']
    %6 = vsyncpa [#allocation3], 0
    %7 = vsyncpa [#allocation4], 0
    %s8 = scalar_lea.sflag [#allocation4], 1
    %9 = vsyncpa %s8, 0
    loop: start=0, step=1, limit=4
    $region2: #{tpu_custom_call.1} parent=1 // loop_pre_header
      _
    $region3: #{tpu_custom_call.1} parent=1 // loop_header
      %s11 = sphi 0, %s15
      %p12 = scmp.ge.s32.totalorder %s11, 4
      %s18 = sphi 0, %s30
      %s19 = sphi 0, %s26
      %s20 = sphi 0, %s18
      %s21 = sphi 0, %s19
      %s22 = sphi 0, %s20
      %s23 = sphi 0, %s21
      %s33 = sphi 0, %s35
      %s36 = sphi 0, %s33
      %s37 = sphi 0, %s36
      %s53 = sphi 0, %s37
      %s61 = sphi 0, %s63
      %s64 = sphi 0, %s61
      %s65 = sphi 0, %s64
      %s81 = sphi 0, %s65
    $region4: #{tpu_custom_call.1} parent=1 // loop_header_branch
      %14 = sbr.rel (%p12) target = $region8
    $region5: #{tpu_custom_call.1} parent=1 // loop_body
      %s16 = ssub.s32 %s11, 1
      %s17 = ssub.s32 %s11, 2
      %s24 = sadd.s32 1, %s19
      %p25 = scmp.ge.s32.totalorder %s24, 2
      %s26 = scalar_select %p25, 0, %s24
      %s27 = sadd.s32 1, %s18
      %s28 = scalar_select %p25, %s27, %s18
      %p29 = scmp.ge.s32.totalorder %s28, 1
      %s30 = scalar_select %p29, 0, %s28
      %s31 = ssub.s32 %s18, %s30
      %p32 = scmp.eq.s32.totalorder %s31, 0
      %s34 = sadd.s32 %s33, 1
      %s35 = scalar_select %p32, %s33, %s34
      %p38 = pneg %p32
      %p39 = scmp.eq.s32.totalorder %s11, 1
      %p40 = por %p38, %p39
      %p41 = scmp.ne.s32.totalorder %s33, %s36
      %p42 = scmp.eq.s32.totalorder %s11, 0
      %p43 = por %p41, %p42
      %p44 = scmp.ne.s32.totalorder %s33, %s36
      %p45 = scmp.eq.s32.totalorder %s16, 1
      %p46 = por %p44, %p45
      %p47 = scmp.ne.s32.totalorder %s36, %s37
      %p48 = scmp.eq.s32.totalorder %s16, 0
      %p49 = por %p47, %p48
      %p50 = scmp.ne.s32.totalorder %s36, %s37
      %p51 = scmp.eq.s32.totalorder %s17, 1
      %p52 = por %p50, %p51
      %p54 = scmp.ne.s32.totalorder %s37, %s53
      %p55 = scmp.eq.s32.totalorder %s17, 0
      %p56 = por %p54, %p55
      %s57 = ssub.s32 %s19, %s26
      %s58 = ssub.s32 %s18, %s30
      %s59 = sor.u32 %s57, %s58
      %p60 = scmp.eq.s32.totalorder %s59, 0
      %s62 = sadd.s32 %s61, 1
      %s63 = scalar_select %p60, %s61, %s62
      %p66 = pneg %p60
      %p67 = scmp.eq.s32.totalorder %s11, 1
      %p68 = por %p66, %p67
      %p69 = scmp.ne.s32.totalorder %s61, %s64
      %p70 = scmp.eq.s32.totalorder %s11, 0
      %p71 = por %p69, %p70
      %p72 = scmp.ne.s32.totalorder %s61, %s64
      %p73 = scmp.eq.s32.totalorder %s16, 1
      %p74 = por %p72, %p73
      %p75 = scmp.ne.s32.totalorder %s64, %s65
      %p76 = scmp.eq.s32.totalorder %s16, 0
      %p77 = por %p75, %p76
      %p78 = scmp.ne.s32.totalorder %s64, %s65
      %p79 = scmp.eq.s32.totalorder %s17, 1
      %p80 = por %p78, %p79
      %p82 = scmp.ne.s32.totalorder %s65, %s81
      %p83 = scmp.eq.s32.totalorder %s17, 0
      %p84 = por %p82, %p83
      %p85 = scmp.le.s32.totalorder 1, %s11
      %p86 = scmp.lt.s32.totalorder %s11, 3
      %p87 = pnand %p85, %p86
      %p88 = pneg %p87
      // Predicated region
      $region9: #{tpu_custom_call.1} parent=5 // pred_check
        _
      $region10: #{tpu_custom_call.1} parent=5 // pred_check_branch
        %90 = sbr.rel (%p87) target = $region12
      $region11: #{tpu_custom_call.1} parent=5 // pred_region
        %s91 = ssub.s32 %s11, 1
        // Predicated region
        $region13: #{tpu_custom_call.1} parent=11 // pred_check
          %p92 = pneg %p49
        $region14: #{tpu_custom_call.1} parent=11 // pred_check_branch
          %94 = sbr.rel (%p92) target = $region16
        $region15: #{tpu_custom_call.1} parent=11 // pred_region
          %s95 = smul.u32 8, %s20
          %s96 = ssub.s32 10, %s95
          %p97 = scmp.lt.s32.totalorder %s96, 8
          %s98 = scalar_select %p97, %s96, 8
          %s99 = smul.u32 128, %s98
          %s100 = smul.u32 %s99, 2
          %s102 = ssub.s32 2048, %s100
          %103 = vsyncadd [#allocation3], %s102
          %p104 = scmp.ne.s32.totalorder 0, %s100
          %s105 = smul.addr %s95, 2
          %s106 = smul.addr %s105, 128
          %s107 = scalar_lea.hbm %s0, %s106
          %s108 = smul.u32 16, %s98
          %s109 = sshll.u32 [#allocation2], 4
          %s110 = int_to_ptr.vmem [resolvable:$true] %s109
          %s111 = sshll.u32 %s108, 4
          %115 = dma.hbm_to_vmem [thread:$0]  (%p104), %s107, %s111, %s110, [#allocation3], 256, 256, 16
        $region16: #{tpu_custom_call.1} parent=11 // pred_fallthru
          _
      $region12: #{tpu_custom_call.1} parent=5 // pred_fallthru
        _
      %p116 = scmp.lt.s32.totalorder %s11, 2
      // Predicated region
      $region17: #{tpu_custom_call.1} parent=5 // pred_check
        %p117 = pneg %p116
      $region18: #{tpu_custom_call.1} parent=5 // pred_check_branch
        %119 = sbr.rel (%p117) target = $region20
      $region19: #{tpu_custom_call.1} parent=5 // pred_region
        _
      $region20: #{tpu_custom_call.1} parent=5 // pred_fallthru
        _
      %p120 = scmp.le.s32.totalorder 1, %s11
      %p121 = scmp.lt.s32.totalorder %s11, 3
      %p122 = pnand %p120, %p121
      %p123 = pneg %p122
      // Predicated region
      $region21: #{tpu_custom_call.1} parent=5 // pred_check
        _
      $region22: #{tpu_custom_call.1} parent=5 // pred_check_branch
        %125 = sbr.rel (%p122) target = $region24
      $region23: #{tpu_custom_call.1} parent=5 // pred_region
        %s126 = ssub.s32 %s11, 1
        // Predicated region
        $region25: #{tpu_custom_call.1} parent=23 // pred_check
          %p127 = pneg %p49
        $region26: #{tpu_custom_call.1} parent=23 // pred_check_branch
          %129 = sbr.rel (%p127) target = $region28
        $region27: #{tpu_custom_call.1} parent=23 // pred_region
          %130 = dma.done [#allocation3], 2048
        $region28: #{tpu_custom_call.1} parent=23 // pred_fallthru
          _
        %p131 = pneg %p49
        %p132 = pneg %p46
        %p133 = pneg %p77
        %p134 = pneg %p74
        %s135 = sand.u32 %s64, 1
        %s136 = scalar_lea.sflag [#allocation4], %s135
        %s137 = sand.u32 %s64, 1
        %s138 = smul.addr %s137, 128
        %s139 = scalar_lea.vmem [#allocation5], %s138
        %s140 = smul.u32 8, %s20
        %s141 = ssub.s32 10, %s140
        %p142 = scmp.lt.s32.totalorder %s141, 8
        %s143 = scalar_select %p142, %s141, 8
        %s144 = smul.u32 128, %s143
        %s145 = smul.u32 %s144, 2
        %s146 = smul.u32 8, %s20
        %v147 = vld [vmem:[#allocation2] sm:$0xff]
        %v148 = vld [vmem:[#allocation2 + $0x8] sm:$0xff]
        %v149 = vld [vmem:[#allocation2 + $0x10] sm:$0xff]
        %v150 = vld [vmem:[#allocation2 + $0x18] sm:$0xff]
        %v151 = vld [vmem:[#allocation2 + $0x20] sm:$0xff]
        %v152 = vld [vmem:[#allocation2 + $0x28] sm:$0xff]
        %v153 = vld [vmem:[#allocation2 + $0x30] sm:$0xff]
        %v154 = vld [vmem:[#allocation2 + $0x38] sm:$0xff]
        %v155 = vld [vmem:[#allocation2 + $0x40] sm:$0xff]
        %v156 = vld [vmem:[#allocation2 + $0x48] sm:$0xff]
        %v157 = vld [vmem:[#allocation2 + $0x50] sm:$0xff]
        %v158 = vld [vmem:[#allocation2 + $0x58] sm:$0xff]
        %v159 = vld [vmem:[#allocation2 + $0x60] sm:$0xff]
        %v160 = vld [vmem:[#allocation2 + $0x68] sm:$0xff]
        %v161 = vld [vmem:[#allocation2 + $0x70] sm:$0xff]
        %v162 = vld [vmem:[#allocation2 + $0x78] sm:$0xff]
        %163 = vst [vmem:[%s139] sm:$0xff] %v147
        %164 = vst [vmem:[%s139 + $0x8] sm:$0xff] %v148
        %165 = vst [vmem:[%s139 + $0x10] sm:$0xff] %v149
        %166 = vst [vmem:[%s139 + $0x18] sm:$0xff] %v150
        %167 = vst [vmem:[%s139 + $0x20] sm:$0xff] %v151
        %168 = vst [vmem:[%s139 + $0x28] sm:$0xff] %v152
        %169 = vst [vmem:[%s139 + $0x30] sm:$0xff] %v153
        %170 = vst [vmem:[%s139 + $0x38] sm:$0xff] %v154
        %171 = vst [vmem:[%s139 + $0x40] sm:$0xff] %v155
        %172 = vst [vmem:[%s139 + $0x48] sm:$0xff] %v156
        %173 = vst [vmem:[%s139 + $0x50] sm:$0xff] %v157
        %174 = vst [vmem:[%s139 + $0x58] sm:$0xff] %v158
        %175 = vst [vmem:[%s139 + $0x60] sm:$0xff] %v159
        %176 = vst [vmem:[%s139 + $0x68] sm:$0xff] %v160
        %177 = vst [vmem:[%s139 + $0x70] sm:$0xff] %v161
        %178 = vst [vmem:[%s139 + $0x78] sm:$0xff] %v162
        %s179 = sand.u32 %s64, 1
        %s180 = scalar_lea.sflag [#allocation4], %s179
        %s181 = sand.u32 %s64, 1
        %s182 = smul.addr %s181, 128
        %s183 = scalar_lea.vmem [#allocation5], %s182
        // Predicated region
        $region29: #{tpu_custom_call.1} parent=23 // pred_check
          %p184 = pneg %p74
        $region30: #{tpu_custom_call.1} parent=23 // pred_check_branch
          %186 = sbr.rel (%p184) target = $region32
        $region31: #{tpu_custom_call.1} parent=23 // pred_region
          %s187 = smul.u32 8, %s20
          %s189 = ssub.s32 2048, 2048
          %190 = vsyncadd %s180, %s189
          %s191 = smul.addr %s187, 2
          %s192 = smul.addr %s21, 16
          %s193 = sadd.s32 %s191, %s192
          %s194 = smul.addr %s193, 128
          %s195 = scalar_lea.hbm %s1, %s194
          %s196 = sshll.u32 %s183, 4
          %s197 = int_to_ptr.vmem [resolvable:$true] %s196
          %202 = dma.vmem_to_hbm [thread:$0]  %s197, 2048, %s195, %s180, 256, 256, 16
        $region32: #{tpu_custom_call.1} parent=23 // pred_fallthru
          _
      $region24: #{tpu_custom_call.1} parent=5 // pred_fallthru
        _
      %p203 = scmp.le.s32.totalorder 2, %s11
      // Predicated region
      $region33: #{tpu_custom_call.1} parent=5 // pred_check
        %p204 = pneg %p203
      $region34: #{tpu_custom_call.1} parent=5 // pred_check_branch
        %206 = sbr.rel (%p204) target = $region36
      $region35: #{tpu_custom_call.1} parent=5 // pred_region
        %s207 = ssub.s32 %s11, 2
        // Predicated region
        $region37: #{tpu_custom_call.1} parent=35 // pred_check
          %p208 = pneg %p80
        $region38: #{tpu_custom_call.1} parent=35 // pred_check_branch
          %210 = sbr.rel (%p208) target = $region40
        $region39: #{tpu_custom_call.1} parent=35 // pred_region
          %s211 = sand.u32 %s65, 1
          %s212 = scalar_lea.sflag [#allocation4], %s211
          %s213 = sand.u32 %s65, 1
          %s214 = smul.addr %s213, 128
          %s215 = scalar_lea.vmem [#allocation5], %s214
          %216 = dma.done %s212, 2048
        $region40: #{tpu_custom_call.1} parent=35 // pred_fallthru
          _
      $region36: #{tpu_custom_call.1} parent=5 // pred_fallthru
        _
    $region6: #{tpu_custom_call.1} parent=1 // loop_footer
      %s15 = sadd.s32 1, %s11
    $region7: #{tpu_custom_call.1} parent=1 // loop_footer_branch
      %10 = sbr.rel target = $region3
    $region8: #{tpu_custom_call.1} parent=1 // loop_exit
      _
    %217 = vsyncpa [#allocation3], 1
    %s218 = scalar_lea.sflag [#allocation3], 1
    %219 = vsyncpa %s218, 1
    %220 = vsyncpa [#allocation4], 1
    %s221 = scalar_lea.sflag [#allocation4], 1
    %222 = vsyncpa %s221, 1

</llo_original>
